<compile_context>
chip_gen: v6e
topology: v6e:2x2x1
jax: 0.10.0
libtpu: 0.0.40
codegen_flags: <defaults>
</compile_context>

<pallas_src>
from functools import partial

import jax
import jax.numpy as jnp
from jax.experimental import pallas as pl
from jax.experimental.pallas import tpu as pltpu


def _round_up(a: int, b: int) -> int:
    return (a + b - 1) // b * b


def backbone_kernel(x_ref, w_ref, cb_ref, hw_ref, hb_ref, out_ref, *, att_col):
    """One row-tile per grid step.

    x_ref  : (TM, KC_pad)     bf16  im2col rows (batch*time flattened)
    w_ref  : (KC_pad, Cout)   bf16  conv weight (im2col layout)
    cb_ref : (1, Cout)        f32   conv bias
    hw_ref : (Cout, H_PAD)    bf16  fused [cls | att | 0-pad] head weight
    hb_ref : (1, H_PAD)       f32   fused head bias
    out_ref: (TM, H_PAD)      bf16  fused head output (lane-dense)
    """
    # Conv1d (all K taps at once via im2col) -> f32 accumulate on the MXU.
    acc = jnp.dot(x_ref[...], w_ref[...], preferred_element_type=jnp.float32)
    emb = jnp.maximum(acc + cb_ref[...], 0.0)                 # ReLU, (TM, Cout) f32

    # Fused cls+att heads: single MXU matmul, lane-dense 128-wide output.
    heads = jnp.dot(emb.astype(hw_ref.dtype), hw_ref[...],
                    preferred_element_type=jnp.float32) + hb_ref[...]

    # Sigmoid only on the attention lane (static column index).  The extra
    # lanes' exps are free EUP filler while the kernel is store/HBM bound.
    lane = jax.lax.broadcasted_iota(jnp.int32, heads.shape, 1)
    out = jnp.where(lane == att_col, jax.nn.sigmoid(heads), heads)
    out_ref[...] = out.astype(out_ref.dtype)                  # bf16 store


@partial(jax.jit, static_argnames=("padding",))
def backbone_forward(x_nct, conv_w, conv_b, cls_w, cls_b, att_w, att_b, *, padding=1):
    """Forward pass matching BackboneNet.forward.

    x_nct  : (N, Cin, T)       -- PyTorch Conv1d layout
    conv_w : (Cout, Cin, K)    -- PyTorch Conv1d weight layout
    conv_b : (Cout,)
    cls_w  : (class_num, Cout) -- PyTorch Linear weight layout
    cls_b  : (class_num,)
    att_w  : (1, Cout)
    att_b  : (1,)

    Returns (clf, att) with shapes (N, T_out, class_num), (N, T_out, 1)
    where T_out = T + 2*padding - K + 1.
    """
    N, Cin, T = x_nct.shape
    Cout, _, K = conv_w.shape
    class_num = cls_w.shape[0]
    T_out = T + 2 * padding - K + 1

    # ------------- plain-JAX glue (fused under jit): im2col + layout -------------
    # Cast to bf16 EARLY so the K-times-blown-up im2col buffer is half size.
    x_ntc = jnp.transpose(x_nct, (0, 2, 1)).astype(jnp.bfloat16)       # (N, T, Cin)
    x_pad = jnp.pad(x_ntc, ((0, 0), (padding, padding), (0, 0)))       # (N, T+2p, Cin)

    # im2col: x_im2col[n, t, k*Cin + c] = x_pad[n, t+k, c]
    cols = [x_pad[:, k:k + T_out, :] for k in range(K)]
    x_im2col = jnp.concatenate(cols, axis=-1)                          # (N, T_out, K*Cin)

    KC = K * Cin
    KC_pad = _round_up(KC, 16)                  # bf16 packs 2 rows/sublane -> 16-align
    rows = N * T_out

    # Row tile: fill the MXU M-dim and amortize per-step overhead; keep >= 2
    # grid steps when the problem is large enough so both v7x TCs get work.
    TM = min(2048, _round_up(rows, 16))
    if rows >= 512 and _round_up(rows, TM) // TM < 2:
        TM = _round_up((rows + 1) // 2, 16)
    rows_pad = _round_up(rows, TM)

    X2 = x_im2col.reshape(rows, KC)
    X2 = jnp.pad(X2, ((0, rows_pad - rows), (0, KC_pad - KC)))         # bf16 already

    # Conv weight -> (K*Cin, Cout) im2col layout, zero-pad contraction dim.
    w2 = jnp.transpose(conv_w, (2, 1, 0)).reshape(KC, Cout)
    w2 = jnp.pad(w2, ((0, KC_pad - KC), (0, 0))).astype(jnp.bfloat16)
    cb = conv_b.reshape(1, Cout).astype(jnp.float32)

    # Fused head weight/bias: [cls | att], zero-padded to a 128-lane-dense output.
    H = class_num + 1
    H_PAD = _round_up(H, 128)
    hw = jnp.concatenate([jnp.transpose(cls_w, (1, 0)),
                          jnp.transpose(att_w, (1, 0))], axis=1)       # (Cout, H)
    hw = jnp.pad(hw, ((0, 0), (0, H_PAD - H))).astype(jnp.bfloat16)
    hb = jnp.concatenate([cls_b, att_b]).reshape(1, H)
    hb = jnp.pad(hb, ((0, 0), (0, H_PAD - H))).astype(jnp.float32)

    grid = (rows_pad // TM,)
    grid_spec = pltpu.PrefetchScalarGridSpec(
        num_scalar_prefetch=0,
        grid=grid,
        in_specs=[
            pl.BlockSpec((TM, KC_pad), lambda r: (r, 0)),     # im2col rows (per tile)
            pl.BlockSpec((KC_pad, Cout), lambda r: (0, 0)),   # conv weight
            pl.BlockSpec((1, Cout), lambda r: (0, 0)),        # conv bias
            pl.BlockSpec((Cout, H_PAD), lambda r: (0, 0)),    # fused head weight
            pl.BlockSpec((1, H_PAD), lambda r: (0, 0)),       # fused head bias
        ],
        out_specs=pl.BlockSpec((TM, H_PAD), lambda r: (r, 0)),
    )

    cost = pl.CostEstimate(
        flops=2 * rows_pad * (KC_pad * Cout + Cout * H_PAD),
        transcendentals=rows_pad * H_PAD,
        bytes_accessed=(X2.size * 2 + w2.size * 2 + hw.size * 2
                        + cb.size * 4 + hb.size * 4
                        + rows_pad * H_PAD * 2),
    )

    fused = pl.pallas_call(
        partial(backbone_kernel, att_col=class_num),
        out_shape=jax.ShapeDtypeStruct((rows_pad, H_PAD), jnp.bfloat16),
        grid_spec=grid_spec,
        compiler_params=pltpu.CompilerParams(
            dimension_semantics=("parallel",)),
        cost_estimate=cost,
    )(X2, w2, cb, hw, hb)

    fused = fused[:rows]                              # drop row padding (keep this!)
    clf = fused[:, :class_num].reshape(N, T_out, class_num).astype(jnp.float32)
    att = fused[:, class_num:class_num + 1].reshape(N, T_out, 1).astype(jnp.float32)
    return clf, att


def _reference_forward(x_nct, conv_w, conv_b, cls_w, cls_b, att_w, att_b, padding=1):
    """Pure-JAX f32 reference mirroring the PyTorch forward (for sanity checking)."""
    emb = jax.lax.conv_general_dilated(
        x_nct.astype(jnp.float32), conv_w.astype(jnp.float32),
        window_strides=(1,), padding=[(padding, padding)],
        dimension_numbers=("NCH", "OIH", "NCH"))
    emb = jax.nn.relu(emb + conv_b[None, :, None])           # (N, Cout, T_out)
    emb_t = jnp.transpose(emb, (0, 2, 1))                    # (N, T_out, Cout)
    clf = emb_t @ cls_w.T + cls_b
    att = jax.nn.sigmoid(emb_t @ att_w.T + att_b)
    return clf, att


if __name__ == "__main__":
    # Module configuration: BackboneNet(in_features=4, class_num=5,
    #                                   layer_params=[(32, 3)])
    in_features = 4
    class_num = 5
    cout, ksize = 32, 3      # layer_params[-1]
    N, T = 2, 16

    key = jax.random.PRNGKey(0)
    ks = jax.random.split(key, 8)

    x = jax.random.normal(ks[0], (N, in_features, T), jnp.float32)

    # Deterministic synthetic parameters (same shapes as the torch module).
    conv_w = jax.random.normal(ks[1], (cout, in_features, ksize), jnp.float32) * 0.2
    conv_b = jax.random.normal(ks[2], (cout,), jnp.float32) * 0.1
    cls_w = jax.random.normal(ks[3], (class_num, cout), jnp.float32) * 0.2
    cls_b = jax.random.normal(ks[4], (class_num,), jnp.float32) * 0.1
    att_w = jax.random.normal(ks[5], (1, cout), jnp.float32) * 0.2
    att_b = jax.random.normal(ks[6], (1,), jnp.float32) * 0.1

    clf, att = backbone_forward(x, conv_w, conv_b, cls_w, cls_b, att_w, att_b)
    jax.block_until_ready((clf, att))

    # Sanity check against the pure-JAX f32 reference (bf16 feeds/output -> loose tol).
    clf_ref, att_ref = _reference_forward(x, conv_w, conv_b, cls_w, cls_b, att_w, att_b)
    assert clf.shape == (N, T, class_num) and att.shape == (N, T, 1)
    assert jnp.allclose(clf, clf_ref, atol=5e-2, rtol=5e-2)
    assert jnp.allclose(att, att_ref, atol=5e-2, rtol=5e-2)

    print("KERNEL_OK")
</pallas_src>

<mosaic_0001>
module attributes {stable_mosaic.version = 11 : i64} {
  func.func @backbone_kernel(%arg0: i32, %arg1: memref<32x16xbf16, #tpu.memory_space<vmem>>, %arg2: memref<16x32xbf16, #tpu.memory_space<vmem>>, %arg3: memref<1x32xf32, #tpu.memory_space<vmem>>, %arg4: memref<32x128xbf16, #tpu.memory_space<vmem>>, %arg5: memref<1x128xf32, #tpu.memory_space<vmem>>, %arg6: memref<32x128xbf16, #tpu.memory_space<vmem>>) attributes {dimension_semantics = [#tpu.dimension_semantics<parallel>], iteration_bounds = array<i64: 1>, scalar_prefetch = 0 : i64, scratch_operands = 0 : i64, tpu.core_type = #tpu.core_type<tc>, window_params = [{transform_indices = @transform_0, window_bounds = array<i64: 32, 16>}, {pipeline_mode = #tpu.pipeline_mode<synchronous>, transform_indices = @transform_1, window_bounds = array<i64: 16, 32>}, {pipeline_mode = #tpu.pipeline_mode<synchronous>, transform_indices = @transform_2, window_bounds = array<i64: 1, 32>}, {pipeline_mode = #tpu.pipeline_mode<synchronous>, transform_indices = @transform_3, window_bounds = array<i64: 32, 128>}, {pipeline_mode = #tpu.pipeline_mode<synchronous>, transform_indices = @transform_4, window_bounds = array<i64: 1, 128>}, {transform_indices = @transform_5, window_bounds = array<i64: 32, 128>}]} {
    %c0 = arith.constant 0 : index
    %c0_0 = arith.constant 0 : index
    %0 = vector.load %arg1[%c0, %c0_0] : memref<32x16xbf16, #tpu.memory_space<vmem>>, vector<32x16xbf16>
    %c0_1 = arith.constant 0 : index
    %c0_2 = arith.constant 0 : index
    %1 = vector.load %arg2[%c0_1, %c0_2] : memref<16x32xbf16, #tpu.memory_space<vmem>>, vector<16x32xbf16>
    %cst = arith.constant dense<0.000000e+00> : vector<32x32xf32>
    %2 = tpu.matmul %0, %1, %cst {dimension_numbers = #tpu.dot_dimension_numbers<[1], [0], [0], [1], [0, 0, 1, 1], [], []>} : vector<32x16xbf16>, vector<16x32xbf16>, vector<32x32xf32> -> vector<32x32xf32>
    %c0_3 = arith.constant 0 : index
    %c0_4 = arith.constant 0 : index
    %3 = vector.load %arg3[%c0_3, %c0_4] : memref<1x32xf32, #tpu.memory_space<vmem>>, vector<1x32xf32>
    %4 = vector.broadcast %3 : vector<1x32xf32> to vector<32x32xf32>
    %5 = arith.addf %2, %4 : vector<32x32xf32>
    %cst_5 = arith.constant 0.000000e+00 : f32
    %6 = vector.broadcast %cst_5 : f32 to vector<32x32xf32>
    %7 = arith.maximumf %5, %6 : vector<32x32xf32>
    %8 = arith.truncf %7 : vector<32x32xf32> to vector<32x32xbf16>
    %c0_6 = arith.constant 0 : index
    %c0_7 = arith.constant 0 : index
    %9 = vector.load %arg4[%c0_6, %c0_7] : memref<32x128xbf16, #tpu.memory_space<vmem>>, vector<32x128xbf16>
    %cst_8 = arith.constant dense<0.000000e+00> : vector<32x128xf32>
    %10 = tpu.matmul %8, %9, %cst_8 {dimension_numbers = #tpu.dot_dimension_numbers<[1], [0], [0], [1], [0, 0, 1, 1], [], []>} : vector<32x32xbf16>, vector<32x128xbf16>, vector<32x128xf32> -> vector<32x128xf32>
    %c0_9 = arith.constant 0 : index
    %c0_10 = arith.constant 0 : index
    %11 = vector.load %arg5[%c0_9, %c0_10] : memref<1x128xf32, #tpu.memory_space<vmem>>, vector<1x128xf32>
    %12 = vector.broadcast %11 : vector<1x128xf32> to vector<32x128xf32>
    %13 = arith.addf %10, %12 : vector<32x128xf32>
    %14 = tpu.iota {dimensions = array<i32: 1>} : vector<32x128xi32>
    %c5_i32 = arith.constant 5 : i32
    %15 = vector.broadcast %c5_i32 : i32 to vector<32x128xi32>
    %16 = arith.cmpi eq, %14, %15 : vector<32x128xi32>
    %17 = arith.negf %13 : vector<32x128xf32>
    %18 = math.exp %17 : vector<32x128xf32>
    %cst_11 = arith.constant 1.000000e+00 : f32
    %19 = vector.broadcast %cst_11 : f32 to vector<32x128xf32>
    %20 = arith.addf %19, %18 : vector<32x128xf32>
    %21 = arith.divf %19, %20 : vector<32x128xf32>
    %22 = arith.select %16, %21, %13 : vector<32x128xi1>, vector<32x128xf32>
    %23 = arith.truncf %22 : vector<32x128xf32> to vector<32x128xbf16>
    %c0_12 = arith.constant 0 : index
    %c0_13 = arith.constant 0 : index
    %24 = vector.load %arg6[%c0_12, %c0_13] : memref<32x128xbf16, #tpu.memory_space<vmem>>, vector<32x128xbf16>
    tpu.vector_store %arg6[%c0_12, %c0_13], %23 {strides = array<i32>} : memref<32x128xbf16, #tpu.memory_space<vmem>>, vector<32x128xbf16>,
    return
  }
  func.func @transform_0(%arg0: i32) -> (i32, i32) {
    %c0_i32 = arith.constant 0 : i32
    %c0_i32_0 = arith.constant 0 : i32
    return %arg0, %c0_i32 : i32, i32
  }
  func.func @transform_1(%arg0: i32) -> (i32, i32) {
    %c0_i32 = arith.constant 0 : i32
    %c0_i32_0 = arith.constant 0 : i32
    %c0_i32_1 = arith.constant 0 : i32
    return %c0_i32, %c0_i32_0 : i32, i32
  }
  func.func @transform_2(%arg0: i32) -> (i32, i32) {
    %c0_i32 = arith.constant 0 : i32
    %c0_i32_0 = arith.constant 0 : i32
    %c0_i32_1 = arith.constant 0 : i32
    return %c0_i32, %c0_i32_0 : i32, i32
  }
  func.func @transform_3(%arg0: i32) -> (i32, i32) {
    %c0_i32 = arith.constant 0 : i32
    %c0_i32_0 = arith.constant 0 : i32
    %c0_i32_1 = arith.constant 0 : i32
    return %c0_i32, %c0_i32_0 : i32, i32
  }
  func.func @transform_4(%arg0: i32) -> (i32, i32) {
    %c0_i32 = arith.constant 0 : i32
    %c0_i32_0 = arith.constant 0 : i32
    %c0_i32_1 = arith.constant 0 : i32
    return %c0_i32, %c0_i32_0 : i32, i32
  }
  func.func @transform_5(%arg0: i32) -> (i32, i32) {
    %c0_i32 = arith.constant 0 : i32
    %c0_i32_0 = arith.constant 0 : i32
    return %arg0, %c0_i32 : i32, i32
  }
}

</mosaic_0001>

<llo_original>
// kernel: backbone_forward.1
$region0: #{backbone_forward.1}
  #allocation0 [shape = 'u32[]', space=smem, size = 0x4, offset = 0x4, fixed_abs, tag = 'smem constant byte address 0x4 - core index']
  #allocation1 [shape = 'u32[144,128]{1,0:T(1,128)}', space=vmem, size = 0x12000, scoped, tag = 'internal scratch']
  %s0 = inlined_call_operand.vmem [shape: bf16[32,16], index: 0, kind: input, shape index: {}]
  %s1 = inlined_call_operand.vmem [shape: bf16[16,32], index: 1, kind: input, shape index: {}]
  %s2 = inlined_call_operand.vmem [shape: f32[1,32], index: 2, kind: input, shape index: {}]
  %s3 = inlined_call_operand.vmem [shape: bf16[32,128], index: 3, kind: input, shape index: {}]
  %s4 = inlined_call_operand.vmem [shape: f32[1,128], index: 4, kind: input, shape index: {}]
  %s5 = inlined_call_operand.vmem [shape: bf16[32,128], index: 5, kind: output, shape index: {}]
  %s6 = sld [smem:[#allocation0]]
  $region30: #{backbone_forward.1} parent=0
    _
  %s8 = ssub.s32 1, %s6
  %s9 = scalar_select 0, %s8, %s6
  // Predicated region
  $region2: #{backbone_forward.1} parent=0 // pred_check
    _
  $region3: #{backbone_forward.1} parent=0 // pred_check_branch
    %11 = sbr.rel (0) target = $region5
  $region4: #{backbone_forward.1} parent=0 // pred_region
    _
  $region5: #{backbone_forward.1} parent=0 // pred_fallthru
    _
  // Predicated region
  $region6: #{backbone_forward.1} parent=0 // pred_check
    _
  $region7: #{backbone_forward.1} parent=0 // pred_check_branch
    %13 = sbr.rel (0) target = $region9
  $region8: #{backbone_forward.1} parent=0 // pred_region
    _
  $region9: #{backbone_forward.1} parent=0 // pred_fallthru
    _
  // Predicated region
  $region10: #{backbone_forward.1} parent=0 // pred_check
    _
  $region11: #{backbone_forward.1} parent=0 // pred_check_branch
    %15 = sbr.rel (0) target = $region13
  $region12: #{backbone_forward.1} parent=0 // pred_region
    _
  $region13: #{backbone_forward.1} parent=0 // pred_fallthru
    _
  // Predicated region
  $region14: #{backbone_forward.1} parent=0 // pred_check
    _
  $region15: #{backbone_forward.1} parent=0 // pred_check_branch
    %17 = sbr.rel (0) target = $region17
  $region16: #{backbone_forward.1} parent=0 // pred_region
    _
  $region17: #{backbone_forward.1} parent=0 // pred_fallthru
    _
  // Predicated region
  $region18: #{backbone_forward.1} parent=0 // pred_check
    _
  $region19: #{backbone_forward.1} parent=0 // pred_check_branch
    %19 = sbr.rel (0) target = $region21
  $region20: #{backbone_forward.1} parent=0 // pred_region
    _
  $region21: #{backbone_forward.1} parent=0 // pred_fallthru
    _
  %v21 = vld [vmem:[%s0] sm:$0xf]
  %v22 = vld [vmem:[%s0 + $0x4] sm:$0xf]
  %v23 = vld [vmem:[%s0 + $0x8] sm:$0xf]
  %v24 = vld [vmem:[%s0 + $0xc] sm:$0xf]
  %v25 = vld [vmem:[%s1] sm:$0xf]
  %v26 = vld [vmem:[%s1 + $0x4] sm:$0xf]
  %v27 = vld [vmem:[%s2] sm:$0x1]
  %v29 = vlaneseq
  %v30 = vshrl.u32 %v29, 7
  %v31 = vsub.s32 0, %v30
  %v32 = vrot.slane %v27, %v31
  %v38 = vunpack.c.l.b16 %v21
  %v39 = vunpack.c.l.b16 %v22
  %v40 = vunpack.c.l.b16 %v23
  %v41 = vunpack.c.l.b16 %v24
  %v42 = vpack.c.b16 %v39, %v38
  %v43 = vpack.c.b16 %v41, %v40
  %v46 = vunpack.c.l.b16 %v25
  %v47 = vunpack.c.l.b16 %v26
  %v48 = vpack.c.b16 %v47, %v46
  %vm50 = vcmask 130048
  %v52 = vsel %vm50, %v42, 0
  %v55 = vsel %vm50, %v43, 0
  %57 = vmatprep.subr.bf16.mxu0 0
  %58 = vmatpush1.bf16.msra.mxu0 0
  %59 = vmatprep.subr.bf16.mxu0 0
  %60 = vmatpush1.bf16.msra.mxu0 0
  %61 = vmatprep.subr.bf16.mxu0 0
  %62 = vmatpush1.bf16.msra.mxu0 0
  %63 = vmatprep.subr.bf16.mxu0 0
  %64 = vmatpush1.bf16.msra.mxu0 0
  %65 = vmatprep.subr.bf16.mxu0 0
  %66 = vmatpush1.bf16.msra.mxu0 0
  %67 = vmatprep.subr.bf16.mxu0 0
  %68 = vmatpush1.bf16.msra.mxu0 0
  %69 = vmatprep.subr.bf16.mxu0 0
  %70 = vmatpush1.bf16.msra.mxu0 0
  %71 = vmatprep.subr.bf16.mxu0 0
  %72 = vmatpush1.bf16.msra.mxu0 %v48
  %73 = vmatprep.subr.bf16.mxu0 0
  %74 = vmatpush2.bf16.msra.mxu0 0
  %75 = vmatprep.subr.bf16.mxu0 0
  %76 = vmatpush2.bf16.msra.mxu0 0
  %77 = vmatprep.subr.bf16.mxu0 0
  %78 = vmatpush2.bf16.msra.mxu0 0
  %79 = vmatprep.subr.bf16.mxu0 0
  %80 = vmatpush2.bf16.msra.mxu0 0
  %81 = vmatprep.subr.bf16.mxu0 0
  %82 = vmatpush2.bf16.msra.mxu0 0
  %83 = vmatprep.subr.bf16.mxu0 0
  %84 = vmatpush2.bf16.msra.mxu0 0
  %85 = vmatprep.subr.bf16.mxu0 0
  %86 = vmatpush2.bf16.msra.mxu0 0
  %87 = vmatprep.subr.bf16.mxu0 0
  %88 = vmatpush2.bf16.msra.mxu0 0
  %89 = vmatprep.mubr.bf16.mxu0 0
  %90 = vmatmul.mubr.bf16.gmra.mxu0 %v52
  %v91 = vpop.f32.mrf.mxu0
  %v92 = vadd.f32 %v32, %v91
  %v93 = vpop.f32.mrf.mxu0
  %v94 = vpop.f32.mrf.mxu0
  %v95 = vadd.f32 %v32, %v94
  %v96 = vpop.f32.mrf.mxu0
  %97 = vmatprep.mubr.bf16.mxu0 0
  %98 = vmatmul.mubr.bf16.gmra.mxu0 %v55
  %v99 = vpop.f32.mrf.mxu0
  %v100 = vadd.f32 %v32, %v99
  %v101 = vpop.f32.mrf.mxu0
  %v102 = vpop.f32.mrf.mxu0
  %v103 = vadd.f32 %v32, %v102
  %v104 = vpop.f32.mrf.mxu0
  %105 = vdwg.mxu0
  %v106 = vmax.f32 %v92, 0.0
  %v107 = vmax.f32 %v95, 0.0
  %v108 = vmax.f32 %v100, 0.0
  %v109 = vmax.f32 %v103, 0.0
  %v110 = vpack.c.bf16 %v107, %v106
  %v111 = vpack.c.bf16 %v109, %v108
  %v112 = vld [vmem:[%s3] sm:$0xf]
  %v113 = vld [vmem:[%s3 + $0x4] sm:$0xf]
  %v114 = vld [vmem:[%s3 + $0x8] sm:$0xf]
  %v115 = vld [vmem:[%s3 + $0xc] sm:$0xf]
  %v116 = vld [vmem:[%s4] sm:$0x1]
  %v118 = vlaneseq
  %v119 = vshrl.u32 %v118, 7
  %v120 = vsub.s32 0, %v119
  %v121 = vrot.slane %v116, %v120
  %v127 = vunpack.c.l.b16 %v112
  %v128 = vunpack.c.l.b16 %v113
  %v129 = vunpack.c.l.b16 %v114
  %v130 = vunpack.c.l.b16 %v115
  %v131 = vpack.c.b16 %v128, %v127
  %v132 = vpack.c.b16 %v130, %v129
  %vm135 = vcmask 261120
  %v137 = vsel %vm135, %v110, 0
  %v140 = vsel %vm135, %v111, 0
  %142 = vmatprep.subr.bf16.mxu0 0
  %143 = vmatpush1.bf16.msra.mxu0 0
  %144 = vmatprep.subr.bf16.mxu0 0
  %145 = vmatpush1.bf16.msra.mxu0 0
  %146 = vmatprep.subr.bf16.mxu0 0
  %147 = vmatpush1.bf16.msra.mxu0 0
  %148 = vmatprep.subr.bf16.mxu0 0
  %149 = vmatpush1.bf16.msra.mxu0 0
  %150 = vmatprep.subr.bf16.mxu0 0
  %151 = vmatpush1.bf16.msra.mxu0 0
  %152 = vmatprep.subr.bf16.mxu0 0
  %153 = vmatpush1.bf16.msra.mxu0 0
  %154 = vmatprep.subr.bf16.mxu0 0
  %155 = vmatpush1.bf16.msra.mxu0 %v132
  %156 = vmatprep.subr.bf16.mxu0 0
  %157 = vmatpush1.bf16.msra.mxu0 %v131
  %158 = vmatprep.subr.bf16.mxu0 0
  %159 = vmatpush2.bf16.msra.mxu0 0
  %160 = vmatprep.subr.bf16.mxu0 0
  %161 = vmatpush2.bf16.msra.mxu0 0
  %162 = vmatprep.subr.bf16.mxu0 0
  %163 = vmatpush2.bf16.msra.mxu0 0
  %164 = vmatprep.subr.bf16.mxu0 0
  %165 = vmatpush2.bf16.msra.mxu0 0
  %166 = vmatprep.subr.bf16.mxu0 0
  %167 = vmatpush2.bf16.msra.mxu0 0
  %168 = vmatprep.subr.bf16.mxu0 0
  %169 = vmatpush2.bf16.msra.mxu0 0
  %170 = vmatprep.subr.bf16.mxu0 0
  %171 = vmatpush2.bf16.msra.mxu0 0
  %172 = vmatprep.subr.bf16.mxu0 0
  %173 = vmatpush2.bf16.msra.mxu0 0
  %174 = vmatprep.mubr.bf16.mxu0 0
  %175 = vmatmul.mubr.bf16.gmra.mxu0 %v137
  %v176 = vpop.f32.mrf.mxu0
  %v177 = vadd.f32 %v121, %v176
  %v178 = vpop.f32.mrf.mxu0
  %v179 = vpop.f32.mrf.mxu0
  %v180 = vadd.f32 %v121, %v179
  %v181 = vpop.f32.mrf.mxu0
  %182 = vmatprep.mubr.bf16.mxu0 0
  %183 = vmatmul.mubr.bf16.gmra.mxu0 %v140
  %v184 = vpop.f32.mrf.mxu0
  %v185 = vadd.f32 %v121, %v184
  %v186 = vpop.f32.mrf.mxu0
  %v187 = vpop.f32.mrf.mxu0
  %v188 = vadd.f32 %v121, %v187
  %v189 = vpop.f32.mrf.mxu0
  %190 = vdwg.mxu0
  %v191 = vlaneseq
  %v192 = vand.u32 %v191, 127
  %vm193 = vcmp.eq.s32.totalorder %v192, 5
  %v194 = vxor.u32 %v177, 2147483648
  %v195 = vxor.u32 %v180, 2147483648
  %v196 = vxor.u32 %v185, 2147483648
  %v197 = vxor.u32 %v188, 2147483648
  %v198 = vmul.f32 %v194, 1.442695
  %v199 = vpow.pop %v198
  %v200 = vmul.f32 %v195, 1.442695
  %v201 = vpow.pop %v200
  %v202 = vmul.f32 %v196, 1.442695
  %v203 = vpow.pop %v202
  %v204 = vmul.f32 %v197, 1.442695
  %v205 = vpow.pop %v204
  %v206 = vadd.f32 %v199, 1.0
  %v207 = vadd.f32 %v201, 1.0
  %v208 = vadd.f32 %v203, 1.0
  %v209 = vadd.f32 %v205, 1.0
  %v210 = vrcp.pop %v206
  %v211 = vmul.f32 1.0, %v210
  %v212 = vrcp.pop %v207
  %v213 = vmul.f32 1.0, %v212
  %v214 = vrcp.pop %v208
  %v215 = vmul.f32 1.0, %v214
  %v216 = vrcp.pop %v209
  %v217 = vmul.f32 1.0, %v216
  %v218 = vsel %vm193, %v211, %v177
  %v219 = vsel %vm193, %v213, %v180
  %v220 = vsel %vm193, %v215, %v185
  %v221 = vsel %vm193, %v217, %v188
  %v222 = vpack.c.bf16 %v219, %v218
  %v223 = vpack.c.bf16 %v221, %v220
  %v226 = vunpack.c.l.b16 %v222
  %v227 = vunpack.c.h.b16 %v222
  %v228 = vunpack.c.l.b16 %v223
  %v229 = vunpack.c.h.b16 %v223
  %v230 = vpack.c.b16 %v226, %v226
  %v231 = vpack.c.b16 %v227, %v227
  %v232 = vpack.c.b16 %v228, %v228
  %v233 = vpack.c.b16 %v229, %v229
  %238 = vst [vmem:[%s5] sm:$0xf] %v230
  %239 = vst [vmem:[%s5 + $0x4] sm:$0xf] %v231
  %240 = vst [vmem:[%s5 + $0x8] sm:$0xf] %v232
  %241 = vst [vmem:[%s5 + $0xc] sm:$0xf] %v233
  // Predicated region
  $region22: #{backbone_forward.1} parent=0 // pred_check
    _
  $region23: #{backbone_forward.1} parent=0 // pred_check_branch
    %243 = sbr.rel (0) target = $region25
  $region24: #{backbone_forward.1} parent=0 // pred_region
    _
  $region25: #{backbone_forward.1} parent=0 // pred_fallthru
    _
  // Predicated region
  $region26: #{backbone_forward.1} parent=0 // pred_check
    _
  $region27: #{backbone_forward.1} parent=0 // pred_check_branch
    %245 = sbr.rel (0) target = $region29
  $region28: #{backbone_forward.1} parent=0 // pred_region
    _
  $region29: #{backbone_forward.1} parent=0 // pred_fallthru
    _

</llo_original>
